<compile_context>
chip_gen: v7x
topology: tpu7x:2x2x1
jax: 0.10.0
libtpu: 0.0.40
codegen_flags: <defaults>
</compile_context>

<pallas_src>
import math
import numpy as np
import jax
import jax.numpy as jnp
from jax.experimental import pallas as pl
from jax.experimental.pallas import tpu as pltpu


def _round_up(n, m):
    return ((n + m - 1) // m) * m


def _binary_classifier_kernel(x_ref, w1t_ref, b1_ref, w2t_ref, b2_ref,
                              w3t_ref, b3_ref, z_ref):
    x_in = x_ref[...]                                              # (TB, H), native dtype

    # x = tanh(input @ W1^T + b1)      -- f32 accumulation on the MXU
    h1 = jnp.tanh(
        jnp.dot(x_in, w1t_ref[...], preferred_element_type=jnp.float32)
        + b1_ref[...])                                             # (TB, H) f32

    # y = tanh(x @ W2^T + b2)
    h2 = jnp.tanh(
        jnp.dot(h1.astype(x_in.dtype), w2t_ref[...],
                preferred_element_type=jnp.float32)
        + b2_ref[...])                                             # (TB, H) f32

    # z = (y + x) @ W3^T + b3
    s = h1 + h2                                                    # residual, f32
    z = (jnp.dot(s.astype(x_in.dtype), w3t_ref[...],
                 preferred_element_type=jnp.float32)
         + b3_ref[...])                                            # (TB, 1) f32

    z_ref[...] = z.astype(z_ref.dtype)


def binary_classifier_forward(input_ftr, w1, b1, w2, b2, w3, b3, *, block_b=256):
    """input_ftr: (B, H); w1,w2: (H, H); w3: (1, H); b1,b2: (H,); b3: (1,).
    Returns logits of shape (B,), matching the PyTorch forward (eval mode)."""
    B, H = input_ftr.shape

    # Batch blocking: TB rows per grid step (MXU-friendly), pad B up if needed.
    TB = block_b if B >= block_b else _round_up(B, 8)
    B_pad = _round_up(B, TB)
    x_p = jnp.pad(input_ftr, ((0, B_pad - B), (0, 0))) if B_pad != B else input_ftr

    # Pre-transpose weights once in the wrapper (free; avoids in-kernel .T).
    w1t = jnp.asarray(w1).T                   # (H, H)
    w2t = jnp.asarray(w2).T                   # (H, H)
    w3t = jnp.asarray(w3).T                   # (H, 1)
    b1r = jnp.asarray(b1).reshape(1, H)
    b2r = jnp.asarray(b2).reshape(1, H)
    b3r = jnp.asarray(b3).reshape(1, 1)

    grid = (B_pad // TB,)
    z2d = pl.pallas_call(
        _binary_classifier_kernel,
        grid=grid,
        in_specs=[
            pl.BlockSpec((TB, H), lambda i: (i, 0)),   # input block
            pl.BlockSpec((H, H), lambda i: (0, 0)),    # W1^T (resident)
            pl.BlockSpec((1, H), lambda i: (0, 0)),    # b1
            pl.BlockSpec((H, H), lambda i: (0, 0)),    # W2^T
            pl.BlockSpec((1, H), lambda i: (0, 0)),    # b2
            pl.BlockSpec((H, 1), lambda i: (0, 0)),    # W3^T
            pl.BlockSpec((1, 1), lambda i: (0, 0)),    # b3
        ],
        out_specs=pl.BlockSpec((TB, 1), lambda i: (i, 0)),
        out_shape=jax.ShapeDtypeStruct((B_pad, 1), input_ftr.dtype),
        compiler_params=pltpu.CompilerParams(
            dimension_semantics=("parallel",),
            vmem_limit_bytes=32 * 1024 * 1024,
        ),
    )(x_p, w1t, b1r, w2t, b2r, w3t, b3r)

    return z2d[:B, 0]                          # squeeze(1) + drop batch padding


def reference_forward(input_ftr, w1, b1, w2, b2, w3, b3):
    """Pure-JAX reference matching the PyTorch forward (eval mode)."""
    h1 = jnp.tanh(input_ftr @ w1.T + b1)
    h2 = jnp.tanh(h1 @ w2.T + b2)
    z = (h2 + h1) @ w3.T + b3
    return z[:, 0]


if __name__ == "__main__":
    B, H = 4, 50   # batch_size, hidden_size (module default hidden_size=50)

    key = jax.random.PRNGKey(0)
    ks = jax.random.split(key, 7)
    input_ftr = jax.random.normal(ks[0], (B, H), dtype=jnp.float32)

    # nn.Linear default init: U(-1/sqrt(fan_in), 1/sqrt(fan_in)) for weight & bias.
    bound = 1.0 / math.sqrt(H)
    w1 = jax.random.uniform(ks[1], (H, H), minval=-bound, maxval=bound, dtype=jnp.float32)
    b1 = jax.random.uniform(ks[2], (H,), minval=-bound, maxval=bound, dtype=jnp.float32)
    w2 = jax.random.uniform(ks[3], (H, H), minval=-bound, maxval=bound, dtype=jnp.float32)
    b2 = jax.random.uniform(ks[4], (H,), minval=-bound, maxval=bound, dtype=jnp.float32)
    w3 = jax.random.uniform(ks[5], (1, H), minval=-bound, maxval=bound, dtype=jnp.float32)
    b3 = jax.random.uniform(ks[6], (1,), minval=-bound, maxval=bound, dtype=jnp.float32)

    z = binary_classifier_forward(input_ftr, w1, b1, w2, b2, w3, b3)
    jax.block_until_ready(z)

    z_ref = reference_forward(input_ftr, w1, b1, w2, b2, w3, b3)
    np.testing.assert_allclose(np.asarray(z), np.asarray(z_ref), atol=1e-5, rtol=1e-5)

    print("KERNEL_OK")
</pallas_src>

<mosaic_0001>
module attributes {stable_mosaic.version = 11 : i64} {
  func.func @_binary_classifier_kernel(%arg0: i32, %arg1: memref<8x50xf32, #tpu.memory_space<vmem>>, %arg2: memref<50x50xf32, #tpu.memory_space<vmem>>, %arg3: memref<1x50xf32, #tpu.memory_space<vmem>>, %arg4: memref<50x50xf32, #tpu.memory_space<vmem>>, %arg5: memref<1x50xf32, #tpu.memory_space<vmem>>, %arg6: memref<50x1xf32, #tpu.memory_space<vmem>>, %arg7: memref<1x1xf32, #tpu.memory_space<vmem>>, %arg8: memref<8x1xf32, #tpu.memory_space<vmem>>) attributes {dimension_semantics = [#tpu.dimension_semantics<parallel>], iteration_bounds = array<i64: 1>, scalar_prefetch = 0 : i64, scratch_operands = 0 : i64, tpu.core_type = #tpu.core_type<tc>, window_params = [{transform_indices = @transform_0, window_bounds = array<i64: 8, 50>}, {pipeline_mode = #tpu.pipeline_mode<synchronous>, transform_indices = @transform_1, window_bounds = array<i64: 50, 50>}, {pipeline_mode = #tpu.pipeline_mode<synchronous>, transform_indices = @transform_2, window_bounds = array<i64: 1, 50>}, {pipeline_mode = #tpu.pipeline_mode<synchronous>, transform_indices = @transform_3, window_bounds = array<i64: 50, 50>}, {pipeline_mode = #tpu.pipeline_mode<synchronous>, transform_indices = @transform_4, window_bounds = array<i64: 1, 50>}, {pipeline_mode = #tpu.pipeline_mode<synchronous>, transform_indices = @transform_5, window_bounds = array<i64: 50, 1>}, {pipeline_mode = #tpu.pipeline_mode<synchronous>, transform_indices = @transform_6, window_bounds = array<i64: 1, 1>}, {transform_indices = @transform_7, window_bounds = array<i64: 8, 1>}]} {
    %c0 = arith.constant 0 : index
    %c0_0 = arith.constant 0 : index
    %0 = vector.load %arg1[%c0, %c0_0] : memref<8x50xf32, #tpu.memory_space<vmem>>, vector<8x50xf32>
    %c0_1 = arith.constant 0 : index
    %c0_2 = arith.constant 0 : index
    %1 = vector.load %arg2[%c0_1, %c0_2] : memref<50x50xf32, #tpu.memory_space<vmem>>, vector<50x50xf32>
    %cst = arith.constant dense<0.000000e+00> : vector<8x50xf32>
    %2 = tpu.matmul %0, %1, %cst {dimension_numbers = #tpu.dot_dimension_numbers<[1], [0], [0], [1], [0, 0, 1, 1], [], []>} : vector<8x50xf32>, vector<50x50xf32>, vector<8x50xf32> -> vector<8x50xf32>
    %c0_3 = arith.constant 0 : index
    %c0_4 = arith.constant 0 : index
    %3 = vector.load %arg3[%c0_3, %c0_4] : memref<1x50xf32, #tpu.memory_space<vmem>>, vector<1x50xf32>
    %4 = vector.broadcast %3 : vector<1x50xf32> to vector<8x50xf32>
    %5 = arith.addf %2, %4 : vector<8x50xf32>
    %6 = math.tanh %5 : vector<8x50xf32>
    %c0_5 = arith.constant 0 : index
    %c0_6 = arith.constant 0 : index
    %7 = vector.load %arg4[%c0_5, %c0_6] : memref<50x50xf32, #tpu.memory_space<vmem>>, vector<50x50xf32>
    %cst_7 = arith.constant dense<0.000000e+00> : vector<8x50xf32>
    %8 = tpu.matmul %6, %7, %cst_7 {dimension_numbers = #tpu.dot_dimension_numbers<[1], [0], [0], [1], [0, 0, 1, 1], [], []>} : vector<8x50xf32>, vector<50x50xf32>, vector<8x50xf32> -> vector<8x50xf32>
    %c0_8 = arith.constant 0 : index
    %c0_9 = arith.constant 0 : index
    %9 = vector.load %arg5[%c0_8, %c0_9] : memref<1x50xf32, #tpu.memory_space<vmem>>, vector<1x50xf32>
    %10 = vector.broadcast %9 : vector<1x50xf32> to vector<8x50xf32>
    %11 = arith.addf %8, %10 : vector<8x50xf32>
    %12 = math.tanh %11 : vector<8x50xf32>
    %13 = arith.addf %6, %12 : vector<8x50xf32>
    %c0_10 = arith.constant 0 : index
    %c0_11 = arith.constant 0 : index
    %14 = vector.load %arg6[%c0_10, %c0_11] : memref<50x1xf32, #tpu.memory_space<vmem>>, vector<50x1xf32>
    %cst_12 = arith.constant dense<0.000000e+00> : vector<8x1xf32>
    %15 = tpu.matmul %13, %14, %cst_12 {dimension_numbers = #tpu.dot_dimension_numbers<[1], [0], [0], [1], [0, 0, 1, 1], [], []>} : vector<8x50xf32>, vector<50x1xf32>, vector<8x1xf32> -> vector<8x1xf32>
    %c0_13 = arith.constant 0 : index
    %c0_14 = arith.constant 0 : index
    %16 = vector.load %arg7[%c0_13, %c0_14] : memref<1x1xf32, #tpu.memory_space<vmem>>, vector<1x1xf32>
    %17 = vector.broadcast %16 : vector<1x1xf32> to vector<8x1xf32>
    %18 = arith.addf %15, %17 : vector<8x1xf32>
    %c0_15 = arith.constant 0 : index
    %c0_16 = arith.constant 0 : index
    %19 = vector.load %arg8[%c0_15, %c0_16] : memref<8x1xf32, #tpu.memory_space<vmem>>, vector<8x1xf32>
    tpu.vector_store %arg8[%c0_15, %c0_16], %18 {strides = array<i32>} : memref<8x1xf32, #tpu.memory_space<vmem>>, vector<8x1xf32>,
    return
  }
  func.func @transform_0(%arg0: i32) -> (i32, i32) {
    %c0_i32 = arith.constant 0 : i32
    %c0_i32_0 = arith.constant 0 : i32
    return %arg0, %c0_i32 : i32, i32
  }
  func.func @transform_1(%arg0: i32) -> (i32, i32) {
    %c0_i32 = arith.constant 0 : i32
    %c0_i32_0 = arith.constant 0 : i32
    %c0_i32_1 = arith.constant 0 : i32
    return %c0_i32, %c0_i32_0 : i32, i32
  }
  func.func @transform_2(%arg0: i32) -> (i32, i32) {
    %c0_i32 = arith.constant 0 : i32
    %c0_i32_0 = arith.constant 0 : i32
    %c0_i32_1 = arith.constant 0 : i32
    return %c0_i32, %c0_i32_0 : i32, i32
  }
  func.func @transform_3(%arg0: i32) -> (i32, i32) {
    %c0_i32 = arith.constant 0 : i32
    %c0_i32_0 = arith.constant 0 : i32
    %c0_i32_1 = arith.constant 0 : i32
    return %c0_i32, %c0_i32_0 : i32, i32
  }
  func.func @transform_4(%arg0: i32) -> (i32, i32) {
    %c0_i32 = arith.constant 0 : i32
    %c0_i32_0 = arith.constant 0 : i32
    %c0_i32_1 = arith.constant 0 : i32
    return %c0_i32, %c0_i32_0 : i32, i32
  }
  func.func @transform_5(%arg0: i32) -> (i32, i32) {
    %c0_i32 = arith.constant 0 : i32
    %c0_i32_0 = arith.constant 0 : i32
    %c0_i32_1 = arith.constant 0 : i32
    return %c0_i32, %c0_i32_0 : i32, i32
  }
  func.func @transform_6(%arg0: i32) -> (i32, i32) {
    %c0_i32 = arith.constant 0 : i32
    %c0_i32_0 = arith.constant 0 : i32
    %c0_i32_1 = arith.constant 0 : i32
    return %c0_i32, %c0_i32_0 : i32, i32
  }
  func.func @transform_7(%arg0: i32) -> (i32, i32) {
    %c0_i32 = arith.constant 0 : i32
    %c0_i32_0 = arith.constant 0 : i32
    return %arg0, %c0_i32 : i32, i32
  }
}

</mosaic_0001>

<llo_original>
// kernel: tpu_custom_call.1
$region0: #{tpu_custom_call.1}
  #allocation0 [shape = 'u32[]', space=smem, size = 0x4, offset = 0x4, fixed_abs, tag = 'smem constant byte address 0x4 - core index']
  #allocation1 [shape = 'u32[144,128]{1,0:T(1,128)}', space=vmem, size = 0x12000, scoped, tag = 'internal scratch']
  #allocation2 [shape = 'f32[1,1]{1,0:T(1,128)S(1)}', space=vmem, size = 0x200, scoped, tag = 'scoped memory for tpu_custom_call.1']
  %s0 = inlined_call_operand.vmem [shape: f32[8,50], index: 0, kind: input, shape index: {}]
  %s1 = inlined_call_operand.vmem [shape: f32[50,50], index: 1, kind: input, shape index: {}]
  %s2 = inlined_call_operand.vmem [shape: f32[1,50], index: 2, kind: input, shape index: {}]
  %s3 = inlined_call_operand.hbm [shape: f32[50,50], index: 3, kind: input, shape index: {}]
  %s4 = inlined_call_operand.vmem [shape: f32[1,50], index: 4, kind: input, shape index: {}]
  %s5 = inlined_call_operand.vmem [shape: f32[50,1], index: 5, kind: input, shape index: {}]
  %s6 = inlined_call_operand.<no memory space> [shape: f32[1,1], index: 6, kind: input, shape index: {}]
  %s7 = inlined_call_operand.vmem [shape: f32[8,1], index: 7, kind: output, shape index: {}]
  %s8 = sld [smem:[#allocation0]]
  $region42: #{tpu_custom_call.1} parent=0
    _
  %s10 = ssub.s32 1, %s8
  %s11 = scalar_select 0, %s10, %s8
  %v12 = vstv %s6
  %13 = vst [vmem:[#allocation2] sm:$0x1] %v12
  $region1: #{tpu_custom_call.1} parent=0
    #allocation3 [shape = 'u8[28672]{0}', space=vmem, size = 0x7000, scoped, tag = 'input window, operand 3, single buffered']
    #allocation4 [shape = 's32[1]{0}', space=sflag, size = 0x4, scoped, tag = 'scoped memory for tpu_custom_call.1']
    %14 = vsyncpa [#allocation4], 0
    // Predicated region
    $region2: #{tpu_custom_call.1} parent=1 // pred_check
      _
    $region3: #{tpu_custom_call.1} parent=1 // pred_check_branch
      %16 = sbr.rel (0) target = $region5
    $region4: #{tpu_custom_call.1} parent=1 // pred_region
      _
    $region5: #{tpu_custom_call.1} parent=1 // pred_fallthru
      _
    // Predicated region
    $region6: #{tpu_custom_call.1} parent=1 // pred_check
      _
    $region7: #{tpu_custom_call.1} parent=1 // pred_check_branch
      %18 = sbr.rel (0) target = $region9
    $region8: #{tpu_custom_call.1} parent=1 // pred_region
      _
    $region9: #{tpu_custom_call.1} parent=1 // pred_fallthru
      _
    // Predicated region
    $region10: #{tpu_custom_call.1} parent=1 // pred_check
      _
    $region11: #{tpu_custom_call.1} parent=1 // pred_check_branch
      %20 = sbr.rel (0) target = $region13
    $region12: #{tpu_custom_call.1} parent=1 // pred_region
      _
    $region13: #{tpu_custom_call.1} parent=1 // pred_fallthru
      _
    // Predicated region
    $region14: #{tpu_custom_call.1} parent=1 // pred_check
      _
    $region15: #{tpu_custom_call.1} parent=1 // pred_check_branch
      %22 = sbr.rel (0) target = $region17
    $region16: #{tpu_custom_call.1} parent=1 // pred_region
      %s24 = ssub.s32 896, 896
      %25 = vsyncadd [#allocation4], %s24
      %s26 = sshll.u32 [#allocation3], 4
      %s27 = int_to_ptr.vmem [resolvable:$true] %s26
      %32 = dma.hbm_to_vmem [thread:$0]  %s3, 896, %s27, [#allocation4], 128, 128, 8
    $region17: #{tpu_custom_call.1} parent=1 // pred_fallthru
      _
    // Predicated region
    $region18: #{tpu_custom_call.1} parent=1 // pred_check
      _
    $region19: #{tpu_custom_call.1} parent=1 // pred_check_branch
      %34 = sbr.rel (0) target = $region21
    $region20: #{tpu_custom_call.1} parent=1 // pred_region
      _
    $region21: #{tpu_custom_call.1} parent=1 // pred_fallthru
      _
    // Predicated region
    $region22: #{tpu_custom_call.1} parent=1 // pred_check
      _
    $region23: #{tpu_custom_call.1} parent=1 // pred_check_branch
      %36 = sbr.rel (0) target = $region25
    $region24: #{tpu_custom_call.1} parent=1 // pred_region
      _
    $region25: #{tpu_custom_call.1} parent=1 // pred_fallthru
      _
    // Predicated region
    $region26: #{tpu_custom_call.1} parent=1 // pred_check
      _
    $region27: #{tpu_custom_call.1} parent=1 // pred_check_branch
      %38 = sbr.rel (0) target = $region29
    $region28: #{tpu_custom_call.1} parent=1 // pred_region
      _
    $region29: #{tpu_custom_call.1} parent=1 // pred_fallthru
      _
    // Predicated region
    $region30: #{tpu_custom_call.1} parent=1 // pred_check
      _
    $region31: #{tpu_custom_call.1} parent=1 // pred_check_branch
      %40 = sbr.rel (0) target = $region33
    $region32: #{tpu_custom_call.1} parent=1 // pred_region
      %41 = dma.done [#allocation4], 896
    $region33: #{tpu_custom_call.1} parent=1 // pred_fallthru
      _
    %v42 = vld [vmem:[%s0] sm:$0xff]
    %v43 = vld [vmem:[%s1] sm:$0xff]
    %v44 = vld [vmem:[%s1 + $0x8] sm:$0xff]
    %v45 = vld [vmem:[%s1 + $0x10] sm:$0xff]
    %v46 = vld [vmem:[%s1 + $0x18] sm:$0xff]
    %v47 = vld [vmem:[%s1 + $0x20] sm:$0xff]
    %v48 = vld [vmem:[%s1 + $0x28] sm:$0xff]
    %v49 = vld [vmem:[%s1 + $0x30] sm:$0x3]
    %v50 = vld [vmem:[%s2] sm:$0x1]
    %v52 = vlaneseq
    %v53 = vshrl.u32 %v52, 7
    %v54 = vsub.s32 0, %v53
    %v55 = vrot.slane %v50, %v54
    %vm57 = vcmask 408576
    %v59 = vsel %vm57, %v42, 0
    %vm61 = vcmask 1041408
    %v63 = vsel %vm61, %v49, 0
    %65 = vmatprep.subr.mxu0 0.0
    %66 = vmatpush1.msra.mxu0 %v43
    %67 = vmatprep.subr.mxu0 0.0
    %68 = vmatpush1.msra.mxu0 %v44
    %69 = vmatprep.subr.mxu0 0.0
    %70 = vmatpush1.msra.mxu0 %v45
    %71 = vmatprep.subr.mxu0 0.0
    %72 = vmatpush1.msra.mxu0 %v46
    %73 = vmatprep.subr.mxu0 0.0
    %74 = vmatpush1.msra.mxu0 %v47
    %75 = vmatprep.subr.mxu0 0.0
    %76 = vmatpush1.msra.mxu0 %v48
    %77 = vmatprep.subr.mxu0 0.0
    %78 = vmatpush1.msra.mxu0 %v63
    %79 = vmatprep.subr.mxu0 0.0
    %80 = vmatpush1.msra.mxu0 0.0
    %81 = vmatprep.subr.mxu0 0.0
    %82 = vmatpush1.msra.mxu0 0.0
    %83 = vmatprep.subr.mxu0 0.0
    %84 = vmatpush1.msra.mxu0 0.0
    %85 = vmatprep.subr.mxu0 0.0
    %86 = vmatpush1.msra.mxu0 0.0
    %87 = vmatprep.subr.mxu0 0.0
    %88 = vmatpush1.msra.mxu0 0.0
    %89 = vmatprep.subr.mxu0 0.0
    %90 = vmatpush1.msra.mxu0 0.0
    %91 = vmatprep.subr.mxu0 0.0
    %92 = vmatpush1.msra.mxu0 0.0
    %93 = vmatprep.subr.mxu0 0.0
    %94 = vmatpush1.msra.mxu0 0.0
    %95 = vmatprep.subr.mxu0 0.0
    %96 = vmatpush1.msra.mxu0 0.0
    %97 = vmatprep.subr.mxu0 0.0
    %98 = vmatpush1.msra.mxu0 0.0
    %99 = vmatprep.subr.mxu0 0.0
    %100 = vmatpush1.msra.mxu0 0.0
    %101 = vmatprep.subr.mxu0 0.0
    %102 = vmatpush1.msra.mxu0 0.0
    %103 = vmatprep.subr.mxu0 0.0
    %104 = vmatpush1.msra.mxu0 0.0
    %105 = vmatprep.subr.mxu0 0.0
    %106 = vmatpush1.msra.mxu0 0.0
    %107 = vmatprep.subr.mxu0 0.0
    %108 = vmatpush1.msra.mxu0 0.0
    %109 = vmatprep.subr.mxu0 0.0
    %110 = vmatpush1.msra.mxu0 0.0
    %111 = vmatprep.subr.mxu0 0.0
    %112 = vmatpush1.msra.mxu0 0.0
    %113 = vmatprep.subr.mxu0 0.0
    %114 = vmatpush1.msra.mxu0 0.0
    %115 = vmatprep.subr.mxu0 0.0
    %116 = vmatpush1.msra.mxu0 0.0
    %117 = vmatprep.subr.mxu0 0.0
    %118 = vmatpush1.msra.mxu0 0.0
    %119 = vmatprep.subr.mxu0 0.0
    %120 = vmatpush1.msra.mxu0 0.0
    %121 = vmatprep.subr.mxu0 0.0
    %122 = vmatpush1.msra.mxu0 0.0
    %123 = vmatprep.subr.mxu0 0.0
    %124 = vmatpush1.msra.mxu0 0.0
    %125 = vmatprep.subr.mxu0 0.0
    %126 = vmatpush1.msra.mxu0 0.0
    %127 = vmatprep.subr.mxu0 0.0
    %128 = vmatpush1.msra.mxu0 0.0
    %129 = vmatprep.mubr.f32.mxu0 0.0
    %130 = vmatmul.mubr.f32.gmra.mrb[0].mxu0 %v59
    %v131 = vpop.f32.mrb[0].mxu0
    %v132 = vadd.f32 %v55, %v131
    %v133 = vpop.f32.mrb[0].mxu0
    %134 = vdwg.mxu0
    %v135 = vtanh.pop %v132
    %v136 = vld [vmem:[#allocation3] sm:$0xff]
    %v137 = vld [vmem:[#allocation3 + $0x8] sm:$0xff]
    %v138 = vld [vmem:[#allocation3 + $0x10] sm:$0xff]
    %v139 = vld [vmem:[#allocation3 + $0x18] sm:$0xff]
    %v140 = vld [vmem:[#allocation3 + $0x20] sm:$0xff]
    %v141 = vld [vmem:[#allocation3 + $0x28] sm:$0xff]
    %v142 = vld [vmem:[#allocation3 + $0x30] sm:$0x3]
    %v143 = vld [vmem:[%s4] sm:$0x1]
    %v145 = vlaneseq
    %v146 = vshrl.u32 %v145, 7
    %v147 = vsub.s32 0, %v146
    %v148 = vrot.slane %v143, %v147
    %v151 = vsel %vm57, %v135, 0
    %v154 = vsel %vm61, %v142, 0
    %156 = vmatprep.subr.mxu0 0.0
    %157 = vmatpush1.msra.mxu0 %v136
    %158 = vmatprep.subr.mxu0 0.0
    %159 = vmatpush1.msra.mxu0 %v137
    %160 = vmatprep.subr.mxu0 0.0
    %161 = vmatpush1.msra.mxu0 %v138
    %162 = vmatprep.subr.mxu0 0.0
    %163 = vmatpush1.msra.mxu0 %v139
    %164 = vmatprep.subr.mxu0 0.0
    %165 = vmatpush1.msra.mxu0 %v140
    %166 = vmatprep.subr.mxu0 0.0
    %167 = vmatpush1.msra.mxu0 %v141
    %168 = vmatprep.subr.mxu0 0.0
    %169 = vmatpush1.msra.mxu0 %v154
    %170 = vmatprep.subr.mxu0 0.0
    %171 = vmatpush1.msra.mxu0 0.0
    %172 = vmatprep.subr.mxu0 0.0
    %173 = vmatpush1.msra.mxu0 0.0
    %174 = vmatprep.subr.mxu0 0.0
    %175 = vmatpush1.msra.mxu0 0.0
    %176 = vmatprep.subr.mxu0 0.0
    %177 = vmatpush1.msra.mxu0 0.0
    %178 = vmatprep.subr.mxu0 0.0
    %179 = vmatpush1.msra.mxu0 0.0
    %180 = vmatprep.subr.mxu0 0.0
    %181 = vmatpush1.msra.mxu0 0.0
    %182 = vmatprep.subr.mxu0 0.0
    %183 = vmatpush1.msra.mxu0 0.0
    %184 = vmatprep.subr.mxu0 0.0
    %185 = vmatpush1.msra.mxu0 0.0
    %186 = vmatprep.subr.mxu0 0.0
    %187 = vmatpush1.msra.mxu0 0.0
    %188 = vmatprep.subr.mxu0 0.0
    %189 = vmatpush1.msra.mxu0 0.0
    %190 = vmatprep.subr.mxu0 0.0
    %191 = vmatpush1.msra.mxu0 0.0
    %192 = vmatprep.subr.mxu0 0.0
    %193 = vmatpush1.msra.mxu0 0.0
    %194 = vmatprep.subr.mxu0 0.0
    %195 = vmatpush1.msra.mxu0 0.0
    %196 = vmatprep.subr.mxu0 0.0
    %197 = vmatpush1.msra.mxu0 0.0
    %198 = vmatprep.subr.mxu0 0.0
    %199 = vmatpush1.msra.mxu0 0.0
    %200 = vmatprep.subr.mxu0 0.0
    %201 = vmatpush1.msra.mxu0 0.0
    %202 = vmatprep.subr.mxu0 0.0
    %203 = vmatpush1.msra.mxu0 0.0
    %204 = vmatprep.subr.mxu0 0.0
    %205 = vmatpush1.msra.mxu0 0.0
    %206 = vmatprep.subr.mxu0 0.0
    %207 = vmatpush1.msra.mxu0 0.0
    %208 = vmatprep.subr.mxu0 0.0
    %209 = vmatpush1.msra.mxu0 0.0
    %210 = vmatprep.subr.mxu0 0.0
    %211 = vmatpush1.msra.mxu0 0.0
    %212 = vmatprep.subr.mxu0 0.0
    %213 = vmatpush1.msra.mxu0 0.0
    %214 = vmatprep.subr.mxu0 0.0
    %215 = vmatpush1.msra.mxu0 0.0
    %216 = vmatprep.subr.mxu0 0.0
    %217 = vmatpush1.msra.mxu0 0.0
    %218 = vmatprep.subr.mxu0 0.0
    %219 = vmatpush1.msra.mxu0 0.0
    %220 = vmatprep.mubr.f32.mxu0 0.0
    %221 = vmatmul.mubr.f32.gmra.mrb[0].mxu0 %v151
    %v222 = vpop.f32.mrb[0].mxu0
    %v223 = vadd.f32 %v148, %v222
    %v224 = vpop.f32.mrb[0].mxu0
    %225 = vdwg.mxu0
    %v226 = vtanh.pop %v223
    %v227 = vadd.f32 %v135, %v226
    %v228 = vld [vmem:[%s5] sm:$0xff]
    %v229 = vld [vmem:[%s5 + $0x8] sm:$0xff]
    %v230 = vld [vmem:[%s5 + $0x10] sm:$0xff]
    %v231 = vld [vmem:[%s5 + $0x18] sm:$0xff]
    %v232 = vld [vmem:[%s5 + $0x20] sm:$0xff]
    %v233 = vld [vmem:[%s5 + $0x28] sm:$0xff]
    %v234 = vld [vmem:[%s5 + $0x30] sm:$0x3]
    %v235 = vld [vmem:[#allocation2] sm:$0x1]
    %v237 = vlaneseq
    %v238 = vshrl.u32 %v237, 7
    %v239 = vsub.s32 0, %v238
    %v240 = vrot.slane %v235, %v239
    %v243 = vsel %vm57, %v227, 0
    %v246 = vsel %vm61, %v234, 0
    %248 = vmatprep.subr.mxu0 0.0
    %249 = vmatpush1.msra.mxu0 %v228
    %250 = vmatprep.subr.mxu0 0.0
    %251 = vmatpush1.msra.mxu0 %v229
    %252 = vmatprep.subr.mxu0 0.0
    %253 = vmatpush1.msra.mxu0 %v230
    %254 = vmatprep.subr.mxu0 0.0
    %255 = vmatpush1.msra.mxu0 %v231
    %256 = vmatprep.subr.mxu0 0.0
    %257 = vmatpush1.msra.mxu0 %v232
    %258 = vmatprep.subr.mxu0 0.0
    %259 = vmatpush1.msra.mxu0 %v233
    %260 = vmatprep.subr.mxu0 0.0
    %261 = vmatpush1.msra.mxu0 %v246
    %262 = vmatprep.subr.mxu0 0.0
    %263 = vmatpush1.msra.mxu0 0.0
    %264 = vmatprep.subr.mxu0 0.0
    %265 = vmatpush1.msra.mxu0 0.0
    %266 = vmatprep.subr.mxu0 0.0
    %267 = vmatpush1.msra.mxu0 0.0
    %268 = vmatprep.subr.mxu0 0.0
    %269 = vmatpush1.msra.mxu0 0.0
    %270 = vmatprep.subr.mxu0 0.0
    %271 = vmatpush1.msra.mxu0 0.0
    %272 = vmatprep.subr.mxu0 0.0
    %273 = vmatpush1.msra.mxu0 0.0
    %274 = vmatprep.subr.mxu0 0.0
    %275 = vmatpush1.msra.mxu0 0.0
    %276 = vmatprep.subr.mxu0 0.0
    %277 = vmatpush1.msra.mxu0 0.0
    %278 = vmatprep.subr.mxu0 0.0
    %279 = vmatpush1.msra.mxu0 0.0
    %280 = vmatprep.subr.mxu0 0.0
    %281 = vmatpush1.msra.mxu0 0.0
    %282 = vmatprep.subr.mxu0 0.0
    %283 = vmatpush1.msra.mxu0 0.0
    %284 = vmatprep.subr.mxu0 0.0
    %285 = vmatpush1.msra.mxu0 0.0
    %286 = vmatprep.subr.mxu0 0.0
    %287 = vmatpush1.msra.mxu0 0.0
    %288 = vmatprep.subr.mxu0 0.0
    %289 = vmatpush1.msra.mxu0 0.0
    %290 = vmatprep.subr.mxu0 0.0
    %291 = vmatpush1.msra.mxu0 0.0
    %292 = vmatprep.subr.mxu0 0.0
    %293 = vmatpush1.msra.mxu0 0.0
    %294 = vmatprep.subr.mxu0 0.0
    %295 = vmatpush1.msra.mxu0 0.0
    %296 = vmatprep.subr.mxu0 0.0
    %297 = vmatpush1.msra.mxu0 0.0
    %298 = vmatprep.subr.mxu0 0.0
    %299 = vmatpush1.msra.mxu0 0.0
    %300 = vmatprep.subr.mxu0 0.0
    %301 = vmatpush1.msra.mxu0 0.0
    %302 = vmatprep.subr.mxu0 0.0
    %303 = vmatpush1.msra.mxu0 0.0
    %304 = vmatprep.subr.mxu0 0.0
    %305 = vmatpush1.msra.mxu0 0.0
    %306 = vmatprep.subr.mxu0 0.0
    %307 = vmatpush1.msra.mxu0 0.0
    %308 = vmatprep.subr.mxu0 0.0
    %309 = vmatpush1.msra.mxu0 0.0
    %310 = vmatprep.subr.mxu0 0.0
    %311 = vmatpush1.msra.mxu0 0.0
    %312 = vmatprep.mubr.f32.mxu0 0.0
    %313 = vmatmul.mubr.f32.gmra.mrb[0].mxu0 %v243
    %v314 = vpop.f32.mrb[0].mxu0
    %v315 = vadd.f32 %v240, %v314
    %v316 = vpop.f32.mrb[0].mxu0
    %317 = vdwg.mxu0
    %vm318 = vcmask 7168
    %319 = vst.msk [vmem:[%s7] sm:$0xff] %vm318, %v315
    // Predicated region
    $region34: #{tpu_custom_call.1} parent=1 // pred_check
      _
    $region35: #{tpu_custom_call.1} parent=1 // pred_check_branch
      %321 = sbr.rel (0) target = $region37
    $region36: #{tpu_custom_call.1} parent=1 // pred_region
      _
    $region37: #{tpu_custom_call.1} parent=1 // pred_fallthru
      _
    // Predicated region
    $region38: #{tpu_custom_call.1} parent=1 // pred_check
      _
    $region39: #{tpu_custom_call.1} parent=1 // pred_check_branch
      %323 = sbr.rel (0) target = $region41
    $region40: #{tpu_custom_call.1} parent=1 // pred_region
      _
    $region41: #{tpu_custom_call.1} parent=1 // pred_fallthru
      _
    %324 = vsyncpa [#allocation4], 1

</llo_original>
